<compile_context>
chip_gen: v5e
topology: v5e:2x2
jax: 0.10.0
libtpu: 0.0.40
codegen_flags: <defaults>
</compile_context>

<pallas_src>
import jax
import jax.numpy as jnp
from jax import lax
from jax.experimental import pallas as pl
from jax.experimental.pallas import tpu as pltpu

_PRECISION = lax.Precision.HIGHEST   # keep f32 activations at f32 on the MXU
_APPLY_CHUNK = 2048                  # max lane columns per in-kernel chunk (fused path)


def _round_up(x, m):
    return (x + m - 1) // m * m


def _default_vmem_budget():
    """~75% of physical VMEM (headroom for Mosaic internal scratch), capped at
    100 MiB; 48 MiB fallback is safe on every generation (incl. v7x's 64 MiB)."""
    try:
        cap = int(pltpu.get_tpu_info().vmem_capacity_bytes)
        return min(int(cap * 3 // 4), 100 << 20)
    except Exception:
        return 48 << 20


def _choose_tiling(n, cap):
    """Pad n to a lane-dense width and pick a tile width tn <= cap.

    Prefers 256-aligned tiles (full 256x256 MXU passes on v6e/v7x; 128 is the
    floor for tiny caps / v5e), minimizes total zero padding, and among equal
    padding picks the largest tile (fewest grid steps)."""
    cap = max(128, int(cap))
    small = _round_up(n, 128)
    if small <= cap:
        return small, small
    step = 256 if cap >= 256 else 128
    best_tn = step
    best_pad = _round_up(n, step)
    t = step
    while t <= cap:
        padded = _round_up(n, t)
        if padded < best_pad or (padded == best_pad and t > best_tn):
            best_pad, best_tn = padded, t
        t += step
    return best_pad, best_tn


def _pad_lanes(x_flat, n_padded):
    """Zero-pad the last (lane) axis. Zero columns are exact for the Gram matrix
    and keep every store lane-dense / unmasked."""
    n = x_flat.shape[-1]
    if n_padded == n:
        return x_flat
    return jnp.pad(x_flat, ((0, 0), (0, 0), (0, n_padded - n)))


# ----------------------------------------------------------------------------
# Fused single-pass kernel (whole (C, Np) slab resident per batch)
# ----------------------------------------------------------------------------
def _make_fused_kernel(n_chunks, chunk):
    def kernel(gamma_ref, x_ref, o_ref):
        def gram(j):
            xc = x_ref[:, pl.ds(j * chunk, chunk)]
            # NT contraction on the shared lane axis -> no materialized x.T.
            return lax.dot_general(
                xc, xc, dimension_numbers=(((1,), (1,)), ((), ())),
                preferred_element_type=jnp.float32, precision=_PRECISION)

        energy = gram(0)
        for j in range(1, n_chunks):
            energy = energy + gram(j)

        # softmax(rowmax(E) - E) == softmax(-E); stable form via one row-min.
        row_min = jnp.min(energy, axis=-1, keepdims=True)
        p = jnp.exp(row_min - energy)
        attn = p / jnp.sum(p, axis=-1, keepdims=True)        # exact divide
        attn_mm = attn.astype(x_ref.dtype)
        gamma = gamma_ref[0]

        for j in range(n_chunks):
            sl = pl.ds(j * chunk, chunk)
            xc = x_ref[:, sl]
            oc = lax.dot_general(
                attn_mm, xc, dimension_numbers=(((1,), (0,)), ((), ())),
                preferred_element_type=jnp.float32, precision=_PRECISION)
            o_ref[:, sl] = (gamma * oc + xc.astype(jnp.float32)).astype(o_ref.dtype)

    return kernel


# ----------------------------------------------------------------------------
# Two-pass streaming kernels
# ----------------------------------------------------------------------------
def cam_attention_kernel(gamma_ref, x_ref, attn_ref, acc_ref):
    """Pass 1: accumulate E = X X^T over lane tiles in an f32 scratch; at the
    last tile fuse softmax, fold gamma in, and emit attention in x.dtype."""
    n = pl.program_id(1)

    @pl.when(n == 0)
    def _init():
        acc_ref[...] = jnp.zeros_like(acc_ref)

    x = x_ref[...]
    acc_ref[...] += lax.dot_general(
        x, x, dimension_numbers=(((1,), (1,)), ((), ())),
        preferred_element_type=jnp.float32, precision=_PRECISION)

    @pl.when(n == pl.num_programs(1) - 1)
    def _softmax():
        energy = acc_ref[...]
        row_min = jnp.min(energy, axis=-1, keepdims=True)
        p = jnp.exp(row_min - energy)
        attn = p / jnp.sum(p, axis=-1, keepdims=True)        # exact divide
        attn_ref[...] = (gamma_ref[0] * attn).astype(attn_ref.dtype)


def cam_apply_kernel(attn_ref, x_ref, o_ref):
    """Pass 2: out_tile = (gamma*attention) @ x_tile + x_tile, lane-dense store."""
    x = x_ref[...]
    out = lax.dot_general(
        attn_ref[...], x, dimension_numbers=(((1,), (0,)), ((), ())),
        preferred_element_type=jnp.float32, precision=_PRECISION)
    o_ref[...] = (out + x.astype(jnp.float32)).astype(o_ref.dtype)


# ----------------------------------------------------------------------------
# Wrapper
# ----------------------------------------------------------------------------
def cam_module_forward(x_nchw, gamma, *, vmem_budget_bytes=None,
                       lane_tile_cap=32768, force_two_pass=False):
    """x_nchw: (B, C, H, W); gamma: scalar / (1,). Returns (B, C, H, W)."""
    B, C, H, W = x_nchw.shape
    N = H * W
    x_dtype = x_nchw.dtype
    itemsize = jnp.dtype(x_dtype).itemsize
    gamma = jnp.asarray(gamma, jnp.float32).reshape(1)
    if vmem_budget_bytes is None:
        vmem_budget_bytes = _default_vmem_budget()

    x_flat = x_nchw.reshape(B, C, N)

    # ---------------- fused single-pass path ---------------------------------
    n_full, chunk = _choose_tiling(N, _APPLY_CHUNK)
    n_chunks = n_full // chunk
    fused_bytes = (4 * C * n_full * itemsize          # 2x-buffered x-in + out slabs
                   + C * chunk * (8 + itemsize)       # per-chunk f32 temporaries
                   + 4 * C * C * 4                    # energy / p / attn
                   + (2 << 20))                       # headroom
    if (not force_two_pass) and fused_bytes <= vmem_budget_bytes:
        x_pad = _pad_lanes(x_flat, n_full)
        out_pad = pl.pallas_call(
            _make_fused_kernel(n_chunks, chunk),
            out_shape=jax.ShapeDtypeStruct((B, C, n_full), x_dtype),
            grid_spec=pltpu.PrefetchScalarGridSpec(
                num_scalar_prefetch=0,
                grid=(B,),
                in_specs=[
                    pl.BlockSpec(memory_space=pltpu.MemorySpace.SMEM),            # gamma
                    pl.BlockSpec((pl.Squeezed(), C, n_full), lambda b: (b, 0, 0)),
                ],
                out_specs=pl.BlockSpec((pl.Squeezed(), C, n_full), lambda b: (b, 0, 0)),
            ),
            compiler_params=pltpu.CompilerParams(
                dimension_semantics=("parallel",),
                vmem_limit_bytes=vmem_budget_bytes,
            ),
        )(gamma, x_pad)
        return out_pad[:, :, :N].reshape(B, C, H, W)

    # ---------------- two-pass streaming path --------------------------------
    # Lane tile sized so the (dominant) pass-2 working set fits the budget:
    #   2*C*tn*itemsize (x in) + 2*C*tn*itemsize (out) + attn + acc + headroom.
    fixed = 2 * C * C * itemsize + C * C * 4 + (2 << 20)
    budget_tn = (vmem_budget_bytes - fixed) // max(1, 4 * C * itemsize)
    tn_cap = max(128, min(int(budget_tn), int(lane_tile_cap)))
    n_padded, tn = _choose_tiling(N, tn_cap)
    n_tiles = n_padded // tn
    x_pad = _pad_lanes(x_flat, n_padded)

    # TODO(synk): for B == 1 on v7x (2 TensorCores), add a parallel grid axis over
    # C row-blocks in pass 1 so both cores share the Gram/softmax work.
    attention = pl.pallas_call(
        cam_attention_kernel,
        out_shape=jax.ShapeDtypeStruct((B, C, C), x_dtype),
        grid_spec=pltpu.PrefetchScalarGridSpec(
            num_scalar_prefetch=0,
            grid=(B, n_tiles),
            in_specs=[
                pl.BlockSpec(memory_space=pltpu.MemorySpace.SMEM),              # gamma
                pl.BlockSpec((pl.Squeezed(), C, tn), lambda b, n: (b, 0, n)),   # x tile
            ],
            out_specs=pl.BlockSpec((pl.Squeezed(), C, C), lambda b, n: (b, 0, 0)),
            scratch_shapes=[pltpu.VMEM((C, C), jnp.float32)],                   # f32 acc
        ),
        compiler_params=pltpu.CompilerParams(
            dimension_semantics=("parallel", "arbitrary"),
            vmem_limit_bytes=vmem_budget_bytes,
        ),
    )(gamma, x_pad)

    out_pad = pl.pallas_call(
        cam_apply_kernel,
        out_shape=jax.ShapeDtypeStruct((B, C, n_padded), x_dtype),
        grid_spec=pltpu.PrefetchScalarGridSpec(
            num_scalar_prefetch=0,
            grid=(B, n_tiles),
            in_specs=[
                pl.BlockSpec((pl.Squeezed(), C, C), lambda b, n: (b, 0, 0)),    # attn
                pl.BlockSpec((pl.Squeezed(), C, tn), lambda b, n: (b, 0, n)),   # x tile
            ],
            out_specs=pl.BlockSpec((pl.Squeezed(), C, tn), lambda b, n: (b, 0, n)),
        ),
        compiler_params=pltpu.CompilerParams(
            dimension_semantics=("parallel", "parallel"),
            vmem_limit_bytes=vmem_budget_bytes,
        ),
    )(attention, x_pad)

    return out_pad[:, :, :N].reshape(B, C, H, W)


# ----------------------------------------------------------------------------
# Pure-JAX reference matching the PyTorch forward
# ----------------------------------------------------------------------------
def cam_reference(x_nchw, gamma):
    B, C, H, W = x_nchw.shape
    x = x_nchw.reshape(B, C, H * W).astype(jnp.float32)
    energy = jnp.einsum("bcn,bdn->bcd", x, x, precision=_PRECISION)
    energy_new = jnp.max(energy, axis=-1, keepdims=True) - energy
    attention = jax.nn.softmax(energy_new, axis=-1)
    out = jnp.einsum("bcd,bdn->bcn", attention, x, precision=_PRECISION)
    out = out.reshape(B, C, H, W)
    g = jnp.asarray(gamma, jnp.float32).reshape(())
    return (g * out + x_nchw.astype(jnp.float32)).astype(x_nchw.dtype)


if __name__ == "__main__":
    key = jax.random.PRNGKey(0)
    B, C, H, W = 2, 4, 16, 16
    x = jax.random.normal(key, (B, C, H, W), dtype=jnp.float32)

    # nn.Parameter(torch.zeros(1)) initializes gamma to 0; use a nonzero value
    # so the attention path is actually exercised (deterministic).
    gamma = jnp.array([0.5], dtype=jnp.float32)

    ref = cam_reference(x, gamma)

    # Fused single-pass path (default at this size).
    out_fused = cam_module_forward(x, gamma)
    jax.block_until_ready(out_fused)
    assert out_fused.shape == (B, C, H, W)
    assert jnp.allclose(out_fused, ref, atol=1e-3, rtol=1e-3), "fused path mismatch"

    # Two-pass streaming path with a small lane tile (exercises the Gram
    # accumulator + softmax epilogue + apply pass).
    out_stream = cam_module_forward(x, gamma, force_two_pass=True, lane_tile_cap=128)
    jax.block_until_ready(out_stream)
    assert jnp.allclose(out_stream, ref, atol=1e-3, rtol=1e-3), "two-pass path mismatch"

    print("KERNEL_OK")
</pallas_src>

<mosaic_0001>
module attributes {stable_mosaic.version = 11 : i64} {
  func.func @kernel(%arg0: i32, %arg1: memref<1xf32, #tpu.memory_space<smem>>, %arg2: memref<1x4x256xf32, #tpu.memory_space<vmem>>, %arg3: memref<1x4x256xf32, #tpu.memory_space<vmem>>) attributes {dimension_semantics = [#tpu.dimension_semantics<parallel>], iteration_bounds = array<i64: 2>, scalar_prefetch = 0 : i64, scratch_operands = 0 : i64, tpu.core_type = #tpu.core_type<tc>, window_params = [{transform_indices = @transform_0, window_bounds = array<i64: 1>}, {transform_indices = @transform_1, window_bounds = array<i64: 1, 4, 256>}, {transform_indices = @transform_2, window_bounds = array<i64: 1, 4, 256>}]} {
    %c0 = arith.constant 0 : index
    %c0_0 = arith.constant 0 : index
    %c0_1 = arith.constant 0 : index
    %0 = vector.load %arg2[%c0, %c0_0, %c0_1] : memref<1x4x256xf32, #tpu.memory_space<vmem>>, vector<1x4x256xf32>
    %1 = vector.shape_cast %0 : vector<1x4x256xf32> to vector<4x256xf32>
    %cst = arith.constant dense<0.000000e+00> : vector<4x4xf32>
    %2 = tpu.matmul %1, %1, %cst {dimension_numbers = #tpu.dot_dimension_numbers<[1], [1], [0], [0], [0, 0, 1, 0], [], []>, precision = #tpu.contract_precision<fp32>} : vector<4x256xf32>, vector<4x256xf32>, vector<4x4xf32> -> vector<4x4xf32>
    %cst_2 = arith.constant dense<0x7F800000> : vector<4xf32>
    %3 = vector.multi_reduction <minimumf>, %2, %cst_2 [1] : vector<4x4xf32> to vector<4xf32>
    %4 = vector.shape_cast %3 : vector<4xf32> to vector<4x1xf32>
    %5 = vector.broadcast %4 : vector<4x1xf32> to vector<4x4xf32>
    %6 = arith.subf %5, %2 : vector<4x4xf32>
    %7 = math.exp %6 : vector<4x4xf32>
    %cst_3 = arith.constant dense<0.000000e+00> : vector<4xf32>
    %8 = vector.multi_reduction <add>, %7, %cst_3 [1] : vector<4x4xf32> to vector<4xf32>
    %9 = vector.shape_cast %8 : vector<4xf32> to vector<4x1xf32>
    %10 = vector.broadcast %9 : vector<4x1xf32> to vector<4x4xf32>
    %11 = arith.divf %7, %10 : vector<4x4xf32>
    %c0_4 = arith.constant 0 : index
    %12 = memref.load %arg1[%c0_4] : memref<1xf32, #tpu.memory_space<smem>>
    %c0_5 = arith.constant 0 : index
    %c0_6 = arith.constant 0 : index
    %c0_7 = arith.constant 0 : index
    %13 = vector.load %arg2[%c0_5, %c0_6, %c0_7] : memref<1x4x256xf32, #tpu.memory_space<vmem>>, vector<1x4x256xf32>
    %14 = vector.shape_cast %13 : vector<1x4x256xf32> to vector<4x256xf32>
    %cst_8 = arith.constant dense<0.000000e+00> : vector<4x256xf32>
    %15 = tpu.matmul %11, %14, %cst_8 {dimension_numbers = #tpu.dot_dimension_numbers<[1], [0], [0], [1], [0, 0, 1, 1], [], []>, precision = #tpu.contract_precision<fp32>} : vector<4x4xf32>, vector<4x256xf32>, vector<4x256xf32> -> vector<4x256xf32>
    %16 = vector.broadcast %12 : f32 to vector<4x256xf32>
    %17 = arith.mulf %16, %15 : vector<4x256xf32>
    %18 = arith.addf %17, %14 : vector<4x256xf32>
    %c0_9 = arith.constant 0 : index
    %c0_10 = arith.constant 0 : index
    %c0_11 = arith.constant 0 : index
    %19 = vector.load %arg3[%c0_9, %c0_10, %c0_11] : memref<1x4x256xf32, #tpu.memory_space<vmem>>, vector<1x4x256xf32>
    %20 = vector.shape_cast %19 : vector<1x4x256xf32> to vector<4x256xf32>
    %21 = vector.shape_cast %18 : vector<4x256xf32> to vector<1x4x256xf32>
    tpu.vector_store %arg3[%c0_9, %c0_10, %c0_11], %21 {strides = array<i32>} : memref<1x4x256xf32, #tpu.memory_space<vmem>>, vector<1x4x256xf32>,
    return
  }
  func.func @transform_0(%arg0: i32) -> i32 {
    %c0_i32 = arith.constant 0 : i32
    %c0_i32_0 = arith.constant 0 : i32
    return %c0_i32 : i32
  }
  func.func @transform_1(%arg0: i32) -> (i32, i32, i32) {
    %c0_i32 = arith.constant 0 : i32
    %c0_i32_0 = arith.constant 0 : i32
    %c0_i32_1 = arith.constant 0 : i32
    return %arg0, %c0_i32, %c0_i32_0 : i32, i32, i32
  }
  func.func @transform_2(%arg0: i32) -> (i32, i32, i32) {
    %c0_i32 = arith.constant 0 : i32
    %c0_i32_0 = arith.constant 0 : i32
    %c0_i32_1 = arith.constant 0 : i32
    return %arg0, %c0_i32, %c0_i32_0 : i32, i32, i32
  }
}

</mosaic_0001>

<llo_original>
// kernel: tpu_custom_call.1
$region0: #{tpu_custom_call.1}
  #allocation0 [shape = 'u32[]', space=smem, size = 0x4, offset = 0x4, fixed_abs, tag = 'smem constant byte address 0x4 - core index']
  #allocation1 [shape = 'u32[72,128]{1,0:T(1,128)}', space=vmem, size = 0x9000, scoped, tag = 'internal scratch']
  #allocation2 [shape = 'f32[1]{0:T(128)S(6)}', space=smem, size = 0x200, scoped, tag = 'scoped memory for tpu_custom_call.1']
  %s0 = inlined_call_operand.<no memory space> [shape: f32[1], index: 0, kind: input, shape index: {}]
  %s1 = inlined_call_operand.hbm [shape: f32[2,4,256], index: 1, kind: input, shape index: {}]
  %s2 = inlined_call_operand.hbm [shape: f32[2,4,256], index: 2, kind: output, shape index: {}]
  %s3 = sld [smem:[#allocation0]]
  $region45: #{tpu_custom_call.1} parent=0
    _
  %s5 = ssub.s32 1, %s3
  %s6 = scalar_select 0, %s5, %s3
  %7 = sst [smem:[#allocation2]] %s0
  $region1: #{tpu_custom_call.1} parent=0
    #allocation3 [shape = 'u8[8192]{0}', space=vmem, size = 0x2000, scoped, tag = 'input window, operand 1']
    #allocation4 [shape = 's32[2]{0}', space=sflag, size = 0x8, scoped, tag = 'scoped memory for tpu_custom_call.1']
    #allocation5 [shape = 's32[2]{0}', space=sflag, size = 0x8, scoped, tag = 'scoped memory for tpu_custom_call.1']
    #allocation6 [shape = 'u8[8192]{0}', space=vmem, size = 0x2000, scoped, tag = 'output window, operand 0']
    %8 = vsyncpa [#allocation4], 0
    %s9 = scalar_lea.sflag [#allocation4], 1
    %10 = vsyncpa %s9, 0
    %11 = vsyncpa [#allocation5], 0
    %s12 = scalar_lea.sflag [#allocation5], 1
    %13 = vsyncpa %s12, 0
    loop: start=0, step=1, limit=4
    $region2: #{tpu_custom_call.1} parent=1 // loop_pre_header
      _
    $region3: #{tpu_custom_call.1} parent=1 // loop_header
      %s15 = sphi 0, %s19
      %p16 = scmp.ge.s32.totalorder %s15, 4
      %s23 = sphi 0, %s23
      %s25 = sphi 0, %s23
      %s26 = sphi 0, %s25
      %s40 = sphi 0, %s26
      %s46 = sphi 0, %s48
      %s49 = sphi 0, %s46
      %s50 = sphi 0, %s49
      %s66 = sphi 0, %s50
      %s72 = sphi 0, %s74
      %s75 = sphi 0, %s72
      %s76 = sphi 0, %s75
      %s92 = sphi 0, %s76
    $region4: #{tpu_custom_call.1} parent=1 // loop_header_branch
      %18 = sbr.rel (%p16) target = $region8
    $region5: #{tpu_custom_call.1} parent=1 // loop_body
      %s20 = ssub.s32 %s15, 1
      %s21 = ssub.s32 %s15, 2
      %s22 = sadd.s32 %s15, 1
      %s24 = sadd.s32 %s23, 1
      %p27 = scmp.eq.s32.totalorder %s15, 1
      %p28 = scmp.ne.s32.totalorder %s23, %s25
      %p29 = scmp.eq.s32.totalorder %s15, 0
      %p30 = por %p28, %p29
      %p31 = scmp.ne.s32.totalorder %s23, %s25
      %p32 = scmp.eq.s32.totalorder %s20, 1
      %p33 = por %p31, %p32
      %p34 = scmp.ne.s32.totalorder %s25, %s26
      %p35 = scmp.eq.s32.totalorder %s20, 0
      %p36 = por %p34, %p35
      %p37 = scmp.ne.s32.totalorder %s25, %s26
      %p38 = scmp.eq.s32.totalorder %s21, 1
      %p39 = por %p37, %p38
      %p41 = scmp.ne.s32.totalorder %s26, %s40
      %p42 = scmp.eq.s32.totalorder %s21, 0
      %p43 = por %p41, %p42
      %s44 = ssub.s32 %s15, %s22
      %p45 = scmp.eq.s32.totalorder %s44, 0
      %s47 = sadd.s32 %s46, 1
      %s48 = scalar_select %p45, %s46, %s47
      %p51 = pneg %p45
      %p52 = scmp.eq.s32.totalorder %s15, 1
      %p53 = por %p51, %p52
      %p54 = scmp.ne.s32.totalorder %s46, %s49
      %p55 = scmp.eq.s32.totalorder %s15, 0
      %p56 = por %p54, %p55
      %p57 = scmp.ne.s32.totalorder %s46, %s49
      %p58 = scmp.eq.s32.totalorder %s20, 1
      %p59 = por %p57, %p58
      %p60 = scmp.ne.s32.totalorder %s49, %s50
      %p61 = scmp.eq.s32.totalorder %s20, 0
      %p62 = por %p60, %p61
      %p63 = scmp.ne.s32.totalorder %s49, %s50
      %p64 = scmp.eq.s32.totalorder %s21, 1
      %p65 = por %p63, %p64
      %p67 = scmp.ne.s32.totalorder %s50, %s66
      %p68 = scmp.eq.s32.totalorder %s21, 0
      %p69 = por %p67, %p68
      %s70 = ssub.s32 %s15, %s22
      %p71 = scmp.eq.s32.totalorder %s70, 0
      %s73 = sadd.s32 %s72, 1
      %s74 = scalar_select %p71, %s72, %s73
      %p77 = pneg %p71
      %p78 = scmp.eq.s32.totalorder %s15, 1
      %p79 = por %p77, %p78
      %p80 = scmp.ne.s32.totalorder %s72, %s75
      %p81 = scmp.eq.s32.totalorder %s15, 0
      %p82 = por %p80, %p81
      %p83 = scmp.ne.s32.totalorder %s72, %s75
      %p84 = scmp.eq.s32.totalorder %s20, 1
      %p85 = por %p83, %p84
      %p86 = scmp.ne.s32.totalorder %s75, %s76
      %p87 = scmp.eq.s32.totalorder %s20, 0
      %p88 = por %p86, %p87
      %p89 = scmp.ne.s32.totalorder %s75, %s76
      %p90 = scmp.eq.s32.totalorder %s21, 1
      %p91 = por %p89, %p90
      %p93 = scmp.ne.s32.totalorder %s76, %s92
      %p94 = scmp.eq.s32.totalorder %s21, 0
      %p95 = por %p93, %p94
      %p96 = scmp.le.s32.totalorder 1, %s15
      %p97 = scmp.lt.s32.totalorder %s15, 3
      %p98 = pnand %p96, %p97
      %p99 = pneg %p98
      // Predicated region
      $region9: #{tpu_custom_call.1} parent=5 // pred_check
        _
      $region10: #{tpu_custom_call.1} parent=5 // pred_check_branch
        %101 = sbr.rel (%p98) target = $region12
      $region11: #{tpu_custom_call.1} parent=5 // pred_region
        %s102 = ssub.s32 %s15, 1
        // Predicated region
        $region13: #{tpu_custom_call.1} parent=11 // pred_check
          %p103 = pneg %p36
        $region14: #{tpu_custom_call.1} parent=11 // pred_check_branch
          %105 = sbr.rel (%p103) target = $region16
        $region15: #{tpu_custom_call.1} parent=11 // pred_region
          _
        $region16: #{tpu_custom_call.1} parent=11 // pred_fallthru
          _
      $region12: #{tpu_custom_call.1} parent=5 // pred_fallthru
        _
      %p106 = scmp.lt.s32.totalorder %s15, 2
      // Predicated region
      $region17: #{tpu_custom_call.1} parent=5 // pred_check
        %p107 = pneg %p106
      $region18: #{tpu_custom_call.1} parent=5 // pred_check_branch
        %109 = sbr.rel (%p107) target = $region20
      $region19: #{tpu_custom_call.1} parent=5 // pred_region
        // Predicated region
        $region21: #{tpu_custom_call.1} parent=19 // pred_check
          %p110 = pneg %p56
        $region22: #{tpu_custom_call.1} parent=19 // pred_check_branch
          %112 = sbr.rel (%p110) target = $region24
        $region23: #{tpu_custom_call.1} parent=19 // pred_region
          %s113 = sand.u32 %s46, 1
          %s114 = scalar_lea.sflag [#allocation4], %s113
          %s115 = sand.u32 %s46, 1
          %s116 = smul.addr %s115, 8
          %s117 = scalar_lea.vmem [#allocation3], %s116
          %119 = vsyncadd %s114, 0
          %s120 = smul.addr %s15, 2
          %s121 = smul.addr %s120, 4
          %s122 = scalar_lea.hbm %s1, %s121
          %s124 = sshll.u32 %s122, 4
          %s125 = int_to_ptr.hbm [resolvable:$true] %s124
          %s126 = sshll.u32 %s117, 4
          %s127 = int_to_ptr.vmem [resolvable:$true] %s126
          %129 = dma.hbm_to_vmem [thread:$0]  %s125, 128, %s127, %s114
        $region24: #{tpu_custom_call.1} parent=19 // pred_fallthru
          _
      $region20: #{tpu_custom_call.1} parent=5 // pred_fallthru
        _
      %p130 = scmp.le.s32.totalorder 1, %s15
      %p131 = scmp.lt.s32.totalorder %s15, 3
      %p132 = pnand %p130, %p131
      %p133 = pneg %p132
      // Predicated region
      $region25: #{tpu_custom_call.1} parent=5 // pred_check
        _
      $region26: #{tpu_custom_call.1} parent=5 // pred_check_branch
        %135 = sbr.rel (%p132) target = $region28
      $region27: #{tpu_custom_call.1} parent=5 // pred_region
        %s136 = ssub.s32 %s15, 1
        %s137 = sand.u32 %s49, 1
        %s138 = scalar_lea.sflag [#allocation4], %s137
        %s139 = sand.u32 %s49, 1
        %s140 = smul.addr %s139, 8
        %s141 = scalar_lea.vmem [#allocation3], %s140
        // Predicated region
        $region29: #{tpu_custom_call.1} parent=27 // pred_check
          %p142 = pneg %p62
        $region30: #{tpu_custom_call.1} parent=27 // pred_check_branch
          %144 = sbr.rel (%p142) target = $region32
        $region31: #{tpu_custom_call.1} parent=27 // pred_region
          %146 = dma.done %s138, 128
        $region32: #{tpu_custom_call.1} parent=27 // pred_fallthru
          _
        %p147 = pneg %p36
        %p148 = pneg %p33
        %s149 = sand.u32 %s49, 1
        %s150 = scalar_lea.sflag [#allocation4], %s149
        %s151 = sand.u32 %s49, 1
        %s152 = smul.addr %s151, 8
        %s153 = scalar_lea.vmem [#allocation3], %s152
        %p154 = pneg %p62
        %p155 = pneg %p59
        %p156 = pneg %p88
        %p157 = pneg %p85
        %s158 = sand.u32 %s75, 1
        %s159 = scalar_lea.sflag [#allocation5], %s158
        %s160 = sand.u32 %s75, 1
        %s161 = smul.addr %s160, 8
        %s162 = scalar_lea.vmem [#allocation6], %s161
        %v163 = vld [vmem:[%s141] sm:$0xff]
        %165 = vst [vmem:[#allocation1] ss:$2 sm:$0xff] %v163
        %v166 = vld.sshfl [vmem:[#allocation1] sm:$0xff pattern:$0x75316420]
        %v167 = vld.sshfl [vmem:[#allocation1 + $0x8] sm:$0xff pattern:$0x75316420]
        %170 = vst [vmem:[#allocation1] ss:$2 sm:$0xff] %v163
        %v171 = vld.sshfl [vmem:[#allocation1] sm:$0xff pattern:$0x75316420]
        %v172 = vld.sshfl [vmem:[#allocation1 + $0x8] sm:$0xff pattern:$0x75316420]
        %175 = vmatpush.xpose.msra.mxu0 0.0
        %176 = vmatpush.xpose.msra.mxu0 0.0
        %177 = vmatpush.xpose.msra.mxu0 0.0
        %178 = vmatpush.xpose.msra.mxu0 0.0
        %179 = vmatpush.xpose.msra.mxu0 0.0
        %180 = vmatpush.xpose.msra.mxu0 0.0
        %181 = vmatpush.xpose.msra.mxu0 0.0
        %182 = vmatpush.xpose.msra.mxu0 0.0
        %183 = vmatpush.xpose.msra.mxu0 0.0
        %184 = vmatpush.xpose.msra.mxu0 0.0
        %185 = vmatpush.xpose.msra.mxu0 0.0
        %186 = vmatpush.xpose.msra.mxu0 0.0
        %187 = vmatpush.xpose.msra.mxu0 0.0
        %188 = vmatpush.xpose.msra.mxu0 0.0
        %189 = vmatpush.xpose.msra.mxu0 0.0
        %v190 = vand.u32 %v171, 4294901760
        %191 = vmatpush.xpose.msra.mxu0 %v190
        %v192 = vand.u32 %v166, 4294901760
        %v193 = vsub.f32 %v166, %v192
        %v194 = vand.u32 %v193, 4294901760
        %v195 = vsub.f32 %v193, %v194
        %v196 = vand.u32 %v195, 4294901760
        %197 = vmatmul.f32.gmra.mxu0 %v196
        %v198 = vpop.f32.mrf.mxu0
        %v199 = vadd.f32 0.0, %v198
        %200 = vdwg.mxu0
        %201 = vmatpush.xpose.msra.mxu0 0.0
        %202 = vmatpush.xpose.msra.mxu0 0.0
        %203 = vmatpush.xpose.msra.mxu0 0.0
        %204 = vmatpush.xpose.msra.mxu0 0.0
        %205 = vmatpush.xpose.msra.mxu0 0.0
        %206 = vmatpush.xpose.msra.mxu0 0.0
        %207 = vmatpush.xpose.msra.mxu0 0.0
        %208 = vmatpush.xpose.msra.mxu0 0.0
        %209 = vmatpush.xpose.msra.mxu0 0.0
        %210 = vmatpush.xpose.msra.mxu0 0.0
        %211 = vmatpush.xpose.msra.mxu0 0.0
        %212 = vmatpush.xpose.msra.mxu0 0.0
        %213 = vmatpush.xpose.msra.mxu0 0.0
        %214 = vmatpush.xpose.msra.mxu0 0.0
        %215 = vmatpush.xpose.msra.mxu0 0.0
        %v216 = vand.u32 %v171, 4294901760
        %v217 = vsub.f32 %v171, %v216
        %v218 = vand.u32 %v217, 4294901760
        %v219 = vsub.f32 %v217, %v218
        %v220 = vand.u32 %v219, 4294901760
        %221 = vmatpush.xpose.msra.mxu0 %v220
        %v222 = vand.u32 %v166, 4294901760
        %223 = vmatmul.f32.gmra.mxu0 %v222
        %v224 = vpop.f32.mrf.mxu0
        %v225 = vadd.f32 %v199, %v224
        %226 = vdwg.mxu0
        %227 = vmatpush.xpose.msra.mxu0 0.0
        %228 = vmatpush.xpose.msra.mxu0 0.0
        %229 = vmatpush.xpose.msra.mxu0 0.0
        %230 = vmatpush.xpose.msra.mxu0 0.0
        %231 = vmatpush.xpose.msra.mxu0 0.0
        %232 = vmatpush.xpose.msra.mxu0 0.0
        %233 = vmatpush.xpose.msra.mxu0 0.0
        %234 = vmatpush.xpose.msra.mxu0 0.0
        %235 = vmatpush.xpose.msra.mxu0 0.0
        %236 = vmatpush.xpose.msra.mxu0 0.0
        %237 = vmatpush.xpose.msra.mxu0 0.0
        %238 = vmatpush.xpose.msra.mxu0 0.0
        %239 = vmatpush.xpose.msra.mxu0 0.0
        %240 = vmatpush.xpose.msra.mxu0 0.0
        %241 = vmatpush.xpose.msra.mxu0 0.0
        %v242 = vand.u32 %v171, 4294901760
        %v243 = vsub.f32 %v171, %v242
        %244 = vmatpush.xpose.msra.mxu0 %v243
        %v245 = vand.u32 %v166, 4294901760
        %v246 = vsub.f32 %v166, %v245
        %247 = vmatmul.f32.gmra.mxu0 %v246
        %v248 = vpop.f32.mrf.mxu0
        %v249 = vadd.f32 %v225, %v248
        %250 = vdwg.mxu0
        %251 = vmatpush.xpose.msra.mxu0 0.0
        %252 = vmatpush.xpose.msra.mxu0 0.0
        %253 = vmatpush.xpose.msra.mxu0 0.0
        %254 = vmatpush.xpose.msra.mxu0 0.0
        %255 = vmatpush.xpose.msra.mxu0 0.0
        %256 = vmatpush.xpose.msra.mxu0 0.0
        %257 = vmatpush.xpose.msra.mxu0 0.0
        %258 = vmatpush.xpose.msra.mxu0 0.0
        %259 = vmatpush.xpose.msra.mxu0 0.0
        %260 = vmatpush.xpose.msra.mxu0 0.0
        %261 = vmatpush.xpose.msra.mxu0 0.0
        %262 = vmatpush.xpose.msra.mxu0 0.0
        %263 = vmatpush.xpose.msra.mxu0 0.0
        %264 = vmatpush.xpose.msra.mxu0 0.0
        %265 = vmatpush.xpose.msra.mxu0 0.0
        %v266 = vand.u32 %v171, 4294901760
        %267 = vmatpush.xpose.msra.mxu0 %v266
        %v268 = vand.u32 %v166, 4294901760
        %v269 = vsub.f32 %v166, %v268
        %v270 = vand.u32 %v269, 4294901760
        %271 = vmatmul.f32.gmra.mxu0 %v270
        %v272 = vpop.f32.mrf.mxu0
        %v273 = vadd.f32 %v249, %v272
        %274 = vdwg.mxu0
        %275 = vmatpush.xpose.msra.mxu0 0.0
        %276 = vmatpush.xpose.msra.mxu0 0.0
        %277 = vmatpush.xpose.msra.mxu0 0.0
        %278 = vmatpush.xpose.msra.mxu0 0.0
        %279 = vmatpush.xpose.msra.mxu0 0.0
        %280 = vmatpush.xpose.msra.mxu0 0.0
        %281 = vmatpush.xpose.msra.mxu0 0.0
        %282 = vmatpush.xpose.msra.mxu0 0.0
        %283 = vmatpush.xpose.msra.mxu0 0.0
        %284 = vmatpush.xpose.msra.mxu0 0.0
        %285 = vmatpush.xpose.msra.mxu0 0.0
        %286 = vmatpush.xpose.msra.mxu0 0.0
        %287 = vmatpush.xpose.msra.mxu0 0.0
        %288 = vmatpush.xpose.msra.mxu0 0.0
        %289 = vmatpush.xpose.msra.mxu0 0.0
        %v290 = vand.u32 %v171, 4294901760
        %v291 = vsub.f32 %v171, %v290
        %v292 = vand.u32 %v291, 4294901760
        %293 = vmatpush.xpose.msra.mxu0 %v292
        %v294 = vand.u32 %v166, 4294901760
        %295 = vmatmul.f32.gmra.mxu0 %v294
        %v296 = vpop.f32.mrf.mxu0
        %v297 = vadd.f32 %v273, %v296
        %298 = vdwg.mxu0
        %299 = vmatpush.xpose.msra.mxu0 0.0
        %300 = vmatpush.xpose.msra.mxu0 0.0
        %301 = vmatpush.xpose.msra.mxu0 0.0
        %302 = vmatpush.xpose.msra.mxu0 0.0
        %303 = vmatpush.xpose.msra.mxu0 0.0
        %304 = vmatpush.xpose.msra.mxu0 0.0
        %305 = vmatpush.xpose.msra.mxu0 0.0
        %306 = vmatpush.xpose.msra.mxu0 0.0
        %307 = vmatpush.xpose.msra.mxu0 0.0
        %308 = vmatpush.xpose.msra.mxu0 0.0
        %309 = vmatpush.xpose.msra.mxu0 0.0
        %310 = vmatpush.xpose.msra.mxu0 0.0
        %311 = vmatpush.xpose.msra.mxu0 0.0
        %312 = vmatpush.xpose.msra.mxu0 0.0
        %313 = vmatpush.xpose.msra.mxu0 0.0
        %v314 = vand.u32 %v171, 4294901760
        %315 = vmatpush.xpose.msra.mxu0 %v314
        %v316 = vand.u32 %v166, 4294901760
        %317 = vmatmul.f32.gmra.mxu0 %v316
        %v318 = vpop.f32.mrf.mxu0
        %v319 = vadd.f32 %v297, %v318
        %320 = vdwg.mxu0
        %321 = vmatpush.xpose.msra.mxu0 0.0
        %322 = vmatpush.xpose.msra.mxu0 0.0
        %323 = vmatpush.xpose.msra.mxu0 0.0
        %324 = vmatpush.xpose.msra.mxu0 0.0
        %325 = vmatpush.xpose.msra.mxu0 0.0
        %326 = vmatpush.xpose.msra.mxu0 0.0
        %327 = vmatpush.xpose.msra.mxu0 0.0
        %328 = vmatpush.xpose.msra.mxu0 0.0
        %329 = vmatpush.xpose.msra.mxu0 0.0
        %330 = vmatpush.xpose.msra.mxu0 0.0
        %331 = vmatpush.xpose.msra.mxu0 0.0
        %332 = vmatpush.xpose.msra.mxu0 0.0
        %333 = vmatpush.xpose.msra.mxu0 0.0
        %334 = vmatpush.xpose.msra.mxu0 0.0
        %335 = vmatpush.xpose.msra.mxu0 0.0
        %v336 = vand.u32 %v172, 4294901760
        %337 = vmatpush.xpose.msra.mxu0 %v336
        %v338 = vand.u32 %v167, 4294901760
        %v339 = vsub.f32 %v167, %v338
        %v340 = vand.u32 %v339, 4294901760
        %v341 = vsub.f32 %v339, %v340
        %v342 = vand.u32 %v341, 4294901760
        %343 = vmatmul.f32.gmra.mxu0 %v342
        %v344 = vpop.f32.mrf.mxu0
        %v345 = vadd.f32 %v319, %v344
        %346 = vdwg.mxu0
        %347 = vmatpush.xpose.msra.mxu0 0.0
        %348 = vmatpush.xpose.msra.mxu0 0.0
        %349 = vmatpush.xpose.msra.mxu0 0.0
        %350 = vmatpush.xpose.msra.mxu0 0.0
        %351 = vmatpush.xpose.msra.mxu0 0.0
        %352 = vmatpush.xpose.msra.mxu0 0.0
        %353 = vmatpush.xpose.msra.mxu0 0.0
        %354 = vmatpush.xpose.msra.mxu0 0.0
        %355 = vmatpush.xpose.msra.mxu0 0.0
        %356 = vmatpush.xpose.msra.mxu0 0.0
        %357 = vmatpush.xpose.msra.mxu0 0.0
        %358 = vmatpush.xpose.msra.mxu0 0.0
        %359 = vmatpush.xpose.msra.mxu0 0.0
        %360 = vmatpush.xpose.msra.mxu0 0.0
        %361 = vmatpush.xpose.msra.mxu0 0.0
        %v362 = vand.u32 %v172, 4294901760
        %v363 = vsub.f32 %v172, %v362
        %v364 = vand.u32 %v363, 4294901760
        %v365 = vsub.f32 %v363, %v364
        %v366 = vand.u32 %v365, 4294901760
        %367 = vmatpush.xpose.msra.mxu0 %v366
        %v368 = vand.u32 %v167, 4294901760
        %369 = vmatmul.f32.gmra.mxu0 %v368
        %v370 = vpop.f32.mrf.mxu0
        %v371 = vadd.f32 %v345, %v370
        %372 = vdwg.mxu0
        %373 = vmatpush.xpose.msra.mxu0 0.0
        %374 = vmatpush.xpose.msra.mxu0 0.0
        %375 = vmatpush.xpose.msra.mxu0 0.0
        %376 = vmatpush.xpose.msra.mxu0 0.0
        %377 = vmatpush.xpose.msra.mxu0 0.0
        %378 = vmatpush.xpose.msra.mxu0 0.0
        %379 = vmatpush.xpose.msra.mxu0 0.0
        %380 = vmatpush.xpose.msra.mxu0 0.0
        %381 = vmatpush.xpose.msra.mxu0 0.0
        %382 = vmatpush.xpose.msra.mxu0 0.0
        %383 = vmatpush.xpose.msra.mxu0 0.0
        %384 = vmatpush.xpose.msra.mxu0 0.0
        %385 = vmatpush.xpose.msra.mxu0 0.0
        %386 = vmatpush.xpose.msra.mxu0 0.0
        %387 = vmatpush.xpose.msra.mxu0 0.0
        %v388 = vand.u32 %v172, 4294901760
        %v389 = vsub.f32 %v172, %v388
        %390 = vmatpush.xpose.msra.mxu0 %v389
        %v391 = vand.u32 %v167, 4294901760
        %v392 = vsub.f32 %v167, %v391
        %393 = vmatmul.f32.gmra.mxu0 %v392
        %v394 = vpop.f32.mrf.mxu0
        %v395 = vadd.f32 %v371, %v394
        %396 = vdwg.mxu0
        %397 = vmatpush.xpose.msra.mxu0 0.0
        %398 = vmatpush.xpose.msra.mxu0 0.0
        %399 = vmatpush.xpose.msra.mxu0 0.0
        %400 = vmatpush.xpose.msra.mxu0 0.0
        %401 = vmatpush.xpose.msra.mxu0 0.0
        %402 = vmatpush.xpose.msra.mxu0 0.0
        %403 = vmatpush.xpose.msra.mxu0 0.0
        %404 = vmatpush.xpose.msra.mxu0 0.0
        %405 = vmatpush.xpose.msra.mxu0 0.0
        %406 = vmatpush.xpose.msra.mxu0 0.0
        %407 = vmatpush.xpose.msra.mxu0 0.0
        %408 = vmatpush.xpose.msra.mxu0 0.0
        %409 = vmatpush.xpose.msra.mxu0 0.0
        %410 = vmatpush.xpose.msra.mxu0 0.0
        %411 = vmatpush.xpose.msra.mxu0 0.0
        %v412 = vand.u32 %v172, 4294901760
        %413 = vmatpush.xpose.msra.mxu0 %v412
        %v414 = vand.u32 %v167, 4294901760
        %v415 = vsub.f32 %v167, %v414
        %v416 = vand.u32 %v415, 4294901760
        %417 = vmatmul.f32.gmra.mxu0 %v416
        %v418 = vpop.f32.mrf.mxu0
        %v419 = vadd.f32 %v395, %v418
        %420 = vdwg.mxu0
        %421 = vmatpush.xpose.msra.mxu0 0.0
        %422 = vmatpush.xpose.msra.mxu0 0.0
        %423 = vmatpush.xpose.msra.mxu0 0.0
        %424 = vmatpush.xpose.msra.mxu0 0.0
        %425 = vmatpush.xpose.msra.mxu0 0.0
        %426 = vmatpush.xpose.msra.mxu0 0.0
        %427 = vmatpush.xpose.msra.mxu0 0.0
        %428 = vmatpush.xpose.msra.mxu0 0.0
        %429 = vmatpush.xpose.msra.mxu0 0.0
        %430 = vmatpush.xpose.msra.mxu0 0.0
        %431 = vmatpush.xpose.msra.mxu0 0.0
        %432 = vmatpush.xpose.msra.mxu0 0.0
        %433 = vmatpush.xpose.msra.mxu0 0.0
        %434 = vmatpush.xpose.msra.mxu0 0.0
        %435 = vmatpush.xpose.msra.mxu0 0.0
        %v436 = vand.u32 %v172, 4294901760
        %v437 = vsub.f32 %v172, %v436
        %v438 = vand.u32 %v437, 4294901760
        %439 = vmatpush.xpose.msra.mxu0 %v438
        %v440 = vand.u32 %v167, 4294901760
        %441 = vmatmul.f32.gmra.mxu0 %v440
        %v442 = vpop.f32.mrf.mxu0
        %v443 = vadd.f32 %v419, %v442
        %444 = vdwg.mxu0
        %445 = vmatpush.xpose.msra.mxu0 0.0
        %446 = vmatpush.xpose.msra.mxu0 0.0
        %447 = vmatpush.xpose.msra.mxu0 0.0
        %448 = vmatpush.xpose.msra.mxu0 0.0
        %449 = vmatpush.xpose.msra.mxu0 0.0
        %450 = vmatpush.xpose.msra.mxu0 0.0
        %451 = vmatpush.xpose.msra.mxu0 0.0
        %452 = vmatpush.xpose.msra.mxu0 0.0
        %453 = vmatpush.xpose.msra.mxu0 0.0
        %454 = vmatpush.xpose.msra.mxu0 0.0
        %455 = vmatpush.xpose.msra.mxu0 0.0
        %456 = vmatpush.xpose.msra.mxu0 0.0
        %457 = vmatpush.xpose.msra.mxu0 0.0
        %458 = vmatpush.xpose.msra.mxu0 0.0
        %459 = vmatpush.xpose.msra.mxu0 0.0
        %v460 = vand.u32 %v172, 4294901760
        %461 = vmatpush.xpose.msra.mxu0 %v460
        %v462 = vand.u32 %v167, 4294901760
        %463 = vmatmul.f32.gmra.mxu0 %v462
        %v464 = vpop.f32.mrf.mxu0
        %v465 = vadd.f32 %v443, %v464
        %466 = vdwg.mxu0
        %vm467 = vcmask 27648
        %v468 = vsel %vm467, %v465, inf
        %469 = vmin.xlane.f32.xlu0 %v468
        %v470 = vpop.xlane.xlu0 %469
        %v471 = vsub.f32 %v470, %v465
        %v472 = vmul.f32 %v471, 1.442695
        %v473 = vpow.pop %v472
        %v474 = vsel %vm467, %v473, 0.0
        %475 = vadd.xlane.f32.xlu0 %v474
        %v476 = vpop.xlane.xlu0 %475
        %v477 = vrcp.pop %v476
        %v478 = vmul.f32 %v476, %v477
        %v479 = vsub.f32 1.0, %v478
        %v480 = vmul.f32 %v477, %v479
        %v481 = vadd.f32 %v477, %v480
        %vm482 = vweird.f32 %v476
        %vm483 = vweird.f32 %v477
        %vm484 = vmor %vm482, %vm483
        %v485 = vsel %vm484, %v477, %v481
        %v486 = vand.u32 2147483647, %v476
        %vm487 = vcmp.eq.f32.partialorder %v486, 8.507059e+37
        %v488 = vand.u32 %v476, 2147483648
        %v489 = vor.u32 1.1754944e-38, %v488
        %v490 = vsel %vm487, %v489, %v485
        %v491 = vmul.f32 %v473, %v490
        %s492 = sld [smem:[#allocation2]]
        %493 = vst [vmem:[#allocation1] ss:$2 sm:$0xff] %v163
        %v494 = vld.sshfl [vmem:[#allocation1] sm:$0xff pattern:$0x75316420]
        %v495 = vld.sshfl [vmem:[#allocation1 + $0x8] sm:$0xff pattern:$0x75316420]
        %vm496 = vcmask 31744
        %v498 = vsel %vm496, %v491, 0
        %vm500 = vcmask 1043456
        %v501 = vsel %vm500, %v494, 0
        %v503 = vsel %vm500, %v495, 0
        %505 = vmatpush.msra.mxu0 0.0
        %506 = vmatpush.msra.mxu0 0.0
        %507 = vmatpush.msra.mxu0 0.0
        %508 = vmatpush.msra.mxu0 0.0
        %509 = vmatpush.msra.mxu0 0.0
        %510 = vmatpush.msra.mxu0 0.0
        %511 = vmatpush.msra.mxu0 0.0
        %512 = vmatpush.msra.mxu0 0.0
        %513 = vmatpush.msra.mxu0 0.0
        %514 = vmatpush.msra.mxu0 0.0
        %515 = vmatpush.msra.mxu0 0.0
        %516 = vmatpush.msra.mxu0 0.0
        %517 = vmatpush.msra.mxu0 0.0
        %518 = vmatpush.msra.mxu0 0.0
        %519 = vmatpush.msra.mxu0 0.0
        %v520 = vand.u32 %v501, 4294901760
        %521 = vmatpush.msra.mxu0 %v520
        %v522 = vand.u32 %v498, 4294901760
        %v523 = vsub.f32 %v498, %v522
        %v524 = vand.u32 %v523, 4294901760
        %v525 = vsub.f32 %v523, %v524
        %v526 = vand.u32 %v525, 4294901760
        %527 = vmatmul.f32.gmra.mxu0 %v526
        %v528 = vpop.f32.mrf.mxu0
        %v529 = vadd.f32 0.0, %v528
        %530 = vdwg.mxu0
        %531 = vmatpush.msra.mxu0 0.0
        %532 = vmatpush.msra.mxu0 0.0
        %533 = vmatpush.msra.mxu0 0.0
        %534 = vmatpush.msra.mxu0 0.0
        %535 = vmatpush.msra.mxu0 0.0
        %536 = vmatpush.msra.mxu0 0.0
        %537 = vmatpush.msra.mxu0 0.0
        %538 = vmatpush.msra.mxu0 0.0
        %539 = vmatpush.msra.mxu0 0.0
        %540 = vmatpush.msra.mxu0 0.0
        %541 = vmatpush.msra.mxu0 0.0
        %542 = vmatpush.msra.mxu0 0.0
        %543 = vmatpush.msra.mxu0 0.0
        %544 = vmatpush.msra.mxu0 0.0
        %545 = vmatpush.msra.mxu0 0.0
        %v546 = vand.u32 %v501, 4294901760
        %v547 = vsub.f32 %v501, %v546
        %v548 = vand.u32 %v547, 4294901760
        %v549 = vsub.f32 %v547, %v548
        %v550 = vand.u32 %v549, 4294901760
        %551 = vmatpush.msra.mxu0 %v550
        %v552 = vand.u32 %v498, 4294901760
        %553 = vmatmul.f32.gmra.mxu0 %v552
        %v554 = vpop.f32.mrf.mxu0
        %v555 = vadd.f32 %v529, %v554
        %556 = vdwg.mxu0
        %557 = vmatpush.msra.mxu0 0.0
        %558 = vmatpush.msra.mxu0 0.0
        %559 = vmatpush.msra.mxu0 0.0
        %560 = vmatpush.msra.mxu0 0.0
        %561 = vmatpush.msra.mxu0 0.0
        %562 = vmatpush.msra.mxu0 0.0
        %563 = vmatpush.msra.mxu0 0.0
        %564 = vmatpush.msra.mxu0 0.0
        %565 = vmatpush.msra.mxu0 0.0
        %566 = vmatpush.msra.mxu0 0.0
        %567 = vmatpush.msra.mxu0 0.0
        %568 = vmatpush.msra.mxu0 0.0
        %569 = vmatpush.msra.mxu0 0.0
        %570 = vmatpush.msra.mxu0 0.0
        %571 = vmatpush.msra.mxu0 0.0
        %v572 = vand.u32 %v501, 4294901760
        %v573 = vsub.f32 %v501, %v572
        %574 = vmatpush.msra.mxu0 %v573
        %v575 = vand.u32 %v498, 4294901760
        %v576 = vsub.f32 %v498, %v575
        %577 = vmatmul.f32.gmra.mxu0 %v576
        %v578 = vpop.f32.mrf.mxu0
        %v579 = vadd.f32 %v555, %v578
        %580 = vdwg.mxu0
        %581 = vmatpush.msra.mxu0 0.0
        %582 = vmatpush.msra.mxu0 0.0
        %583 = vmatpush.msra.mxu0 0.0
        %584 = vmatpush.msra.mxu0 0.0
        %585 = vmatpush.msra.mxu0 0.0
        %586 = vmatpush.msra.mxu0 0.0
        %587 = vmatpush.msra.mxu0 0.0
        %588 = vmatpush.msra.mxu0 0.0
        %589 = vmatpush.msra.mxu0 0.0
        %590 = vmatpush.msra.mxu0 0.0
        %591 = vmatpush.msra.mxu0 0.0
        %592 = vmatpush.msra.mxu0 0.0
        %593 = vmatpush.msra.mxu0 0.0
        %594 = vmatpush.msra.mxu0 0.0
        %595 = vmatpush.msra.mxu0 0.0
        %v596 = vand.u32 %v501, 4294901760
        %597 = vmatpush.msra.mxu0 %v596
        %v598 = vand.u32 %v498, 4294901760
        %v599 = vsub.f32 %v498, %v598
        %v600 = vand.u32 %v599, 4294901760
        %601 = vmatmul.f32.gmra.mxu0 %v600
        %v602 = vpop.f32.mrf.mxu0
        %v603 = vadd.f32 %v579, %v602
        %604 = vdwg.mxu0
        %605 = vmatpush.msra.mxu0 0.0
        %606 = vmatpush.msra.mxu0 0.0
        %607 = vmatpush.msra.mxu0 0.0
        %608 = vmatpush.msra.mxu0 0.0
        %609 = vmatpush.msra.mxu0 0.0
        %610 = vmatpush.msra.mxu0 0.0
        %611 = vmatpush.msra.mxu0 0.0
        %612 = vmatpush.msra.mxu0 0.0
        %613 = vmatpush.msra.mxu0 0.0
        %614 = vmatpush.msra.mxu0 0.0
        %615 = vmatpush.msra.mxu0 0.0
        %616 = vmatpush.msra.mxu0 0.0
        %617 = vmatpush.msra.mxu0 0.0
        %618 = vmatpush.msra.mxu0 0.0
        %619 = vmatpush.msra.mxu0 0.0
        %v620 = vand.u32 %v501, 4294901760
        %v621 = vsub.f32 %v501, %v620
        %v622 = vand.u32 %v621, 4294901760
        %623 = vmatpush.msra.mxu0 %v622
        %v624 = vand.u32 %v498, 4294901760
        %625 = vmatmul.f32.gmra.mxu0 %v624
        %v626 = vpop.f32.mrf.mxu0
        %v627 = vadd.f32 %v603, %v626
        %628 = vdwg.mxu0
        %629 = vmatpush.msra.mxu0 0.0
        %630 = vmatpush.msra.mxu0 0.0
        %631 = vmatpush.msra.mxu0 0.0
        %632 = vmatpush.msra.mxu0 0.0
        %633 = vmatpush.msra.mxu0 0.0
        %634 = vmatpush.msra.mxu0 0.0
        %635 = vmatpush.msra.mxu0 0.0
        %636 = vmatpush.msra.mxu0 0.0
        %637 = vmatpush.msra.mxu0 0.0
        %638 = vmatpush.msra.mxu0 0.0
        %639 = vmatpush.msra.mxu0 0.0
        %640 = vmatpush.msra.mxu0 0.0
        %641 = vmatpush.msra.mxu0 0.0
        %642 = vmatpush.msra.mxu0 0.0
        %643 = vmatpush.msra.mxu0 0.0
        %v644 = vand.u32 %v501, 4294901760
        %645 = vmatpush.msra.mxu0 %v644
        %v646 = vand.u32 %v498, 4294901760
        %647 = vmatmul.f32.gmra.mxu0 %v646
        %v648 = vpop.f32.mrf.mxu0
        %v649 = vadd.f32 %v627, %v648
        %650 = vdwg.mxu0
        %651 = vmatpush.msra.mxu0 0.0
        %652 = vmatpush.msra.mxu0 0.0
        %653 = vmatpush.msra.mxu0 0.0
        %654 = vmatpush.msra.mxu0 0.0
        %655 = vmatpush.msra.mxu0 0.0
        %656 = vmatpush.msra.mxu0 0.0
        %657 = vmatpush.msra.mxu0 0.0
        %658 = vmatpush.msra.mxu0 0.0
        %659 = vmatpush.msra.mxu0 0.0
        %660 = vmatpush.msra.mxu0 0.0
        %661 = vmatpush.msra.mxu0 0.0
        %662 = vmatpush.msra.mxu0 0.0
        %663 = vmatpush.msra.mxu0 0.0
        %664 = vmatpush.msra.mxu0 0.0
        %665 = vmatpush.msra.mxu0 0.0
        %v666 = vand.u32 %v503, 4294901760
        %667 = vmatpush.msra.mxu0 %v666
        %v668 = vand.u32 %v498, 4294901760
        %v669 = vsub.f32 %v498, %v668
        %v670 = vand.u32 %v669, 4294901760
        %v671 = vsub.f32 %v669, %v670
        %v672 = vand.u32 %v671, 4294901760
        %673 = vmatmul.f32.gmra.mxu0 %v672
        %v674 = vpop.f32.mrf.mxu0
        %v675 = vadd.f32 0.0, %v674
        %676 = vdwg.mxu0
        %677 = vmatpush.msra.mxu0 0.0
        %678 = vmatpush.msra.mxu0 0.0
        %679 = vmatpush.msra.mxu0 0.0
        %680 = vmatpush.msra.mxu0 0.0
        %681 = vmatpush.msra.mxu0 0.0
        %682 = vmatpush.msra.mxu0 0.0
        %683 = vmatpush.msra.mxu0 0.0
        %684 = vmatpush.msra.mxu0 0.0
        %685 = vmatpush.msra.mxu0 0.0
        %686 = vmatpush.msra.mxu0 0.0
        %687 = vmatpush.msra.mxu0 0.0
        %688 = vmatpush.msra.mxu0 0.0
        %689 = vmatpush.msra.mxu0 0.0
        %690 = vmatpush.msra.mxu0 0.0
        %691 = vmatpush.msra.mxu0 0.0
        %v692 = vand.u32 %v503, 4294901760
        %v693 = vsub.f32 %v503, %v692
        %v694 = vand.u32 %v693, 4294901760
        %v695 = vsub.f32 %v693, %v694
        %v696 = vand.u32 %v695, 4294901760
        %697 = vmatpush.msra.mxu0 %v696
        %v698 = vand.u32 %v498, 4294901760
        %699 = vmatmul.f32.gmra.mxu0 %v698
        %v700 = vpop.f32.mrf.mxu0
        %v701 = vadd.f32 %v675, %v700
        %702 = vdwg.mxu0
        %703 = vmatpush.msra.mxu0 0.0
        %704 = vmatpush.msra.mxu0 0.0
        %705 = vmatpush.msra.mxu0 0.0
        %706 = vmatpush.msra.mxu0 0.0
        %707 = vmatpush.msra.mxu0 0.0
        %708 = vmatpush.msra.mxu0 0.0
        %709 = vmatpush.msra.mxu0 0.0
        %710 = vmatpush.msra.mxu0 0.0
        %711 = vmatpush.msra.mxu0 0.0
        %712 = vmatpush.msra.mxu0 0.0
        %713 = vmatpush.msra.mxu0 0.0
        %714 = vmatpush.msra.mxu0 0.0
        %715 = vmatpush.msra.mxu0 0.0
        %716 = vmatpush.msra.mxu0 0.0
        %717 = vmatpush.msra.mxu0 0.0
        %v718 = vand.u32 %v503, 4294901760
        %v719 = vsub.f32 %v503, %v718
        %720 = vmatpush.msra.mxu0 %v719
        %v721 = vand.u32 %v498, 4294901760
        %v722 = vsub.f32 %v498, %v721
        %723 = vmatmul.f32.gmra.mxu0 %v722
        %v724 = vpop.f32.mrf.mxu0
        %v725 = vadd.f32 %v701, %v724
        %726 = vdwg.mxu0
        %727 = vmatpush.msra.mxu0 0.0
        %728 = vmatpush.msra.mxu0 0.0
        %729 = vmatpush.msra.mxu0 0.0
        %730 = vmatpush.msra.mxu0 0.0
        %731 = vmatpush.msra.mxu0 0.0
        %732 = vmatpush.msra.mxu0 0.0
        %733 = vmatpush.msra.mxu0 0.0
        %734 = vmatpush.msra.mxu0 0.0
        %735 = vmatpush.msra.mxu0 0.0
        %736 = vmatpush.msra.mxu0 0.0
        %737 = vmatpush.msra.mxu0 0.0
        %738 = vmatpush.msra.mxu0 0.0
        %739 = vmatpush.msra.mxu0 0.0
        %740 = vmatpush.msra.mxu0 0.0
        %741 = vmatpush.msra.mxu0 0.0
        %v742 = vand.u32 %v503, 4294901760
        %743 = vmatpush.msra.mxu0 %v742
        %v744 = vand.u32 %v498, 4294901760
        %v745 = vsub.f32 %v498, %v744
        %v746 = vand.u32 %v745, 4294901760
        %747 = vmatmul.f32.gmra.mxu0 %v746
        %v748 = vpop.f32.mrf.mxu0
        %v749 = vadd.f32 %v725, %v748
        %750 = vdwg.mxu0
        %751 = vmatpush.msra.mxu0 0.0
        %752 = vmatpush.msra.mxu0 0.0
        %753 = vmatpush.msra.mxu0 0.0
        %754 = vmatpush.msra.mxu0 0.0
        %755 = vmatpush.msra.mxu0 0.0
        %756 = vmatpush.msra.mxu0 0.0
        %757 = vmatpush.msra.mxu0 0.0
        %758 = vmatpush.msra.mxu0 0.0
        %759 = vmatpush.msra.mxu0 0.0
        %760 = vmatpush.msra.mxu0 0.0
        %761 = vmatpush.msra.mxu0 0.0
        %762 = vmatpush.msra.mxu0 0.0
        %763 = vmatpush.msra.mxu0 0.0
        %764 = vmatpush.msra.mxu0 0.0
        %765 = vmatpush.msra.mxu0 0.0
        %v766 = vand.u32 %v503, 4294901760
        %v767 = vsub.f32 %v503, %v766
        %v768 = vand.u32 %v767, 4294901760
        %769 = vmatpush.msra.mxu0 %v768
        %v770 = vand.u32 %v498, 4294901760
        %771 = vmatmul.f32.gmra.mxu0 %v770
        %v772 = vpop.f32.mrf.mxu0
        %v773 = vadd.f32 %v749, %v772
        %774 = vdwg.mxu0
        %775 = vmatpush.msra.mxu0 0.0
        %776 = vmatpush.msra.mxu0 0.0
        %777 = vmatpush.msra.mxu0 0.0
        %778 = vmatpush.msra.mxu0 0.0
        %779 = vmatpush.msra.mxu0 0.0
        %780 = vmatpush.msra.mxu0 0.0
        %781 = vmatpush.msra.mxu0 0.0
        %782 = vmatpush.msra.mxu0 0.0
        %783 = vmatpush.msra.mxu0 0.0
        %784 = vmatpush.msra.mxu0 0.0
        %785 = vmatpush.msra.mxu0 0.0
        %786 = vmatpush.msra.mxu0 0.0
        %787 = vmatpush.msra.mxu0 0.0
        %788 = vmatpush.msra.mxu0 0.0
        %789 = vmatpush.msra.mxu0 0.0
        %v790 = vand.u32 %v503, 4294901760
        %791 = vmatpush.msra.mxu0 %v790
        %v792 = vand.u32 %v498, 4294901760
        %793 = vmatmul.f32.gmra.mxu0 %v792
        %v794 = vpop.f32.mrf.mxu0
        %v795 = vadd.f32 %v773, %v794
        %796 = vdwg.mxu0
        %v797 = vstv %s492
        %v798 = vmul.f32 %v797, %v649
        %v799 = vmul.f32 %v797, %v795
        %800 = vst [vmem:[#allocation1] ss:$2 sm:$0xff] %v163
        %v801 = vld.sshfl [vmem:[#allocation1] sm:$0xff pattern:$0x75316420]
        %v802 = vld.sshfl [vmem:[#allocation1 + $0x8] sm:$0xff pattern:$0x75316420]
        %v805 = vadd.f32 %v798, %v801
        %v806 = vadd.f32 %v799, %v802
        %v809 = vrot.slane %v806, 4
        %v810 = vsel %vm500, %v805, %v809
        %812 = vst [vmem:[%s162] sm:$0xff] %v810
        %s813 = sand.u32 %s75, 1
        %s814 = scalar_lea.sflag [#allocation5], %s813
        %s815 = sand.u32 %s75, 1
        %s816 = smul.addr %s815, 8
        %s817 = scalar_lea.vmem [#allocation6], %s816
        // Predicated region
        $region33: #{tpu_custom_call.1} parent=27 // pred_check
          %p818 = pneg %p85
        $region34: #{tpu_custom_call.1} parent=27 // pred_check_branch
          %820 = sbr.rel (%p818) target = $region36
        $region35: #{tpu_custom_call.1} parent=27 // pred_region
          %822 = vsyncadd %s814, 0
          %s823 = smul.addr %s20, 2
          %s824 = smul.addr %s823, 4
          %s825 = scalar_lea.hbm %s2, %s824
          %s827 = sshll.u32 %s817, 4
          %s828 = int_to_ptr.vmem [resolvable:$true] %s827
          %s829 = sshll.u32 %s825, 4
          %s830 = int_to_ptr.hbm [resolvable:$true] %s829
          %832 = dma.vmem_to_hbm [thread:$0]  %s828, 128, %s830, %s814
        $region36: #{tpu_custom_call.1} parent=27 // pred_fallthru
          _
      $region28: #{tpu_custom_call.1} parent=5 // pred_fallthru
        _
      %p833 = scmp.le.s32.totalorder 2, %s15
      // Predicated region
      $region37: #{tpu_custom_call.1} parent=5 // pred_check
        %p834 = pneg %p833
      $region38: #{tpu_custom_call.1} parent=5 // pred_check_branch
        %836 = sbr.rel (%p834) target = $region40
      $region39: #{tpu_custom_call.1} parent=5 // pred_region
        %s837 = ssub.s32 %s15, 2
        // Predicated region
        $region41: #{tpu_custom_call.1} parent=39 // pred_check
          %p838 = pneg %p91
        $region42: #{tpu_custom_call.1} parent=39 // pred_check_branch
          %840 = sbr.rel (%p838) target = $region44
        $region43: #{tpu_custom_call.1} parent=39 // pred_region
          %s841 = sand.u32 %s76, 1
          %s842 = scalar_lea.sflag [#allocation5], %s841
          %s843 = sand.u32 %s76, 1
          %s844 = smul.addr %s843, 8
          %s845 = scalar_lea.vmem [#allocation6], %s844
          %847 = dma.done %s842, 128
        $region44: #{tpu_custom_call.1} parent=39 // pred_fallthru
          _
      $region40: #{tpu_custom_call.1} parent=5 // pred_fallthru
        _
    $region6: #{tpu_custom_call.1} parent=1 // loop_footer
      %s19 = sadd.s32 1, %s15
    $region7: #{tpu_custom_call.1} parent=1 // loop_footer_branch
      %14 = sbr.rel target = $region3
    $region8: #{tpu_custom_call.1} parent=1 // loop_exit
      _
    %848 = vsyncpa [#allocation4], 1
    %s849 = scalar_lea.sflag [#allocation4], 1
    %850 = vsyncpa %s849, 1
    %851 = vsyncpa [#allocation5], 1
    %s852 = scalar_lea.sflag [#allocation5], 1
    %853 = vsyncpa %s852, 1

</llo_original>
